<compile_context>
chip_gen: v5e
topology: v5e:2x2
jax: 0.10.0
libtpu: 0.0.40
codegen_flags: <defaults>
</compile_context>

<pallas_src>
import jax
import jax.numpy as jnp
from jax import lax
from jax.experimental import pallas as pl
from jax.experimental.pallas import tpu as pltpu

OBS_DIM = 4      # CartPole-v1 observation_space.shape[0]
ACT_DIM = 2      # CartPole-v1 action_space.n
HIDDEN = 64

LANE = 128       # vreg lane width
X_AUG = 5        # obs rows 0:4, row 4 = ones (bias fold)
H_AUG = 72       # hidden rows 0:64, row 64 = ones, rows 65:72 = 0 (sublane pad)

MAX_CHUNKS_PER_TILE = 64   # 8192 batch lanes per grid step


# ---------------------------------------------------------------------------
# Kernel
# ---------------------------------------------------------------------------
def mlp_policy_kernel(xT_ref, w1_ref, w2_ref, w3_ref, oT_ref):
    # xT_ref: (X_AUG, tb)  bf16   rows 0:4 = obs.T, row 4 = ones
    # w1_ref: (H_AUG, X_AUG) bf16 augmented [W1 | b1], row 64 regenerates ones
    # w2_ref: (H_AUG, H_AUG) bf16 augmented [W2 | b2]
    # w3_ref: (ACT_DIM, H_AUG) bf16 augmented [W3 | b3]
    # oT_ref: (ACT_DIM, tb) f32   logits.T
    w1 = w1_ref[...]
    w2 = w2_ref[...]
    w3 = w3_ref[...]

    n_chunks = oT_ref.shape[1] // LANE   # static

    def chunk(c, carry):
        col = pl.multiple_of(c * LANE, LANE)
        x = xT_ref[:, pl.ds(col, LANE)]                                   # (5, 128) bf16
        # bf16 MXU operands, f32 accumulate, f32 ReLU.
        h1 = jnp.maximum(
            jnp.dot(w1, x, preferred_element_type=jnp.float32), 0.0)     # (72, 128) f32
        h2 = jnp.maximum(
            jnp.dot(w2, h1.astype(jnp.bfloat16),
                    preferred_element_type=jnp.float32), 0.0)            # (72, 128) f32
        logits = jnp.dot(w3, h2.astype(jnp.bfloat16),
                         preferred_element_type=jnp.float32)             # (2, 128) f32
        oT_ref[:, pl.ds(col, LANE)] = logits.astype(oT_ref.dtype)
        return carry

    lax.fori_loop(0, n_chunks, chunk, 0, unroll=(n_chunks <= 8))


# ---------------------------------------------------------------------------
# Parameter packing (PyTorch nn.Linear layout: w (out, in), b (out,))
# ---------------------------------------------------------------------------
def pack_params(p):
    """Build the three bias-augmented bf16 weight matrices."""
    w1a = jnp.zeros((H_AUG, X_AUG), jnp.float32)
    w1a = w1a.at[:HIDDEN, :OBS_DIM].set(p["w1"].astype(jnp.float32))
    w1a = w1a.at[:HIDDEN, OBS_DIM].set(p["b1"].astype(jnp.float32))
    w1a = w1a.at[HIDDEN, OBS_DIM].set(1.0)          # regenerates the ones row

    w2a = jnp.zeros((H_AUG, H_AUG), jnp.float32)
    w2a = w2a.at[:HIDDEN, :HIDDEN].set(p["w2"].astype(jnp.float32))
    w2a = w2a.at[:HIDDEN, HIDDEN].set(p["b2"].astype(jnp.float32))
    w2a = w2a.at[HIDDEN, HIDDEN].set(1.0)

    w3a = jnp.zeros((ACT_DIM, H_AUG), jnp.float32)
    w3a = w3a.at[:, :HIDDEN].set(p["w3"].astype(jnp.float32))
    w3a = w3a.at[:, HIDDEN].set(p["b3"].astype(jnp.float32))

    return (w1a.astype(jnp.bfloat16),
            w2a.astype(jnp.bfloat16),
            w3a.astype(jnp.bfloat16))


# ---------------------------------------------------------------------------
# Tiling
# ---------------------------------------------------------------------------
def _num_tensorcores():
    """2 for megacore / multi-TC chips (v4, v5p, v7x); 1 for v5e/v6e."""
    try:
        kind = str(getattr(jax.devices()[0], "device_kind", "")).lower()
        if any(tag in kind for tag in ("v4", "v5p", "v7", "7x")):
            return 2
    except Exception:
        pass
    return 1


def _batch_tiling(B, batch_tile=None, num_cores=1):
    """Return (tile_batch, num_tiles, padded_batch); tiles are multiples of 128."""
    chunks = max(1, pl.cdiv(B, LANE))
    if batch_tile is not None:
        cpt = max(1, pl.cdiv(int(batch_tile), LANE))
    else:
        num_tiles = pl.cdiv(chunks, MAX_CHUNKS_PER_TILE)
        if num_cores >= 2 and chunks >= 2:
            # Even tile count >= 2 so both TensorCores get balanced work.
            num_tiles = max(num_tiles, 2)
            if num_tiles % 2:
                num_tiles += 1
        cpt = pl.cdiv(chunks, num_tiles)
    num_tiles = pl.cdiv(chunks, cpt)
    tb = cpt * LANE
    return tb, num_tiles, tb * num_tiles


# ---------------------------------------------------------------------------
# Forward wrapper
# ---------------------------------------------------------------------------
def mlp_policy_forward(x, packed_params, *, batch_tile=None):
    """x: (B, OBS_DIM) float. packed_params: tuple from pack_params(). -> (B, ACT_DIM) f32."""
    w1a, w2a, w3a = packed_params
    B = x.shape[0]
    tb, num_tiles, B_pad = _batch_tiling(B, batch_tile, _num_tensorcores())

    # Augmented, transposed, bf16 input (features-on-sublanes, batch-on-lanes).
    # TODO(synk): for large rollout batches, fuse the downstream softmax /
    # sampling consumer into the kernel to avoid this wrapper-side layout pass.
    xT = jnp.zeros((X_AUG, B_pad), jnp.bfloat16)
    xT = xT.at[OBS_DIM, :].set(1.0)                               # ones row (bias fold)
    xT = xT.at[:OBS_DIM, :B].set(x.astype(jnp.bfloat16).T)

    flops = 2 * B_pad * (X_AUG * H_AUG + H_AUG * H_AUG + H_AUG * ACT_DIM)
    bytes_accessed = (xT.size * 2 + ACT_DIM * B_pad * 4
                      + (w1a.size + w2a.size + w3a.size) * 2)

    outT = pl.pallas_call(
        mlp_policy_kernel,
        out_shape=jax.ShapeDtypeStruct((ACT_DIM, B_pad), jnp.float32),
        grid_spec=pltpu.PrefetchScalarGridSpec(
            num_scalar_prefetch=0,
            grid=(num_tiles,),
            in_specs=[
                pl.BlockSpec((X_AUG, tb), lambda i: (0, i)),        # batch tile on lanes
                pl.BlockSpec((H_AUG, X_AUG), lambda i: (0, 0)),     # weights resident
                pl.BlockSpec((H_AUG, H_AUG), lambda i: (0, 0)),
                pl.BlockSpec((ACT_DIM, H_AUG), lambda i: (0, 0)),
            ],
            out_specs=pl.BlockSpec((ACT_DIM, tb), lambda i: (0, i)),
        ),
        compiler_params=pltpu.CompilerParams(
            dimension_semantics=("parallel",),
        ),
        cost_estimate=pl.CostEstimate(
            flops=flops, transcendentals=0, bytes_accessed=bytes_accessed
        ),
    )(xT, w1a, w2a, w3a)

    # Strip padding, return PyTorch-convention (B, ACT_DIM) logits.
    return outT[:, :B].T


# ---------------------------------------------------------------------------
# Reference & init
# ---------------------------------------------------------------------------
def init_params(key):
    """PyTorch nn.Linear default init: U(-1/sqrt(fan_in), 1/sqrt(fan_in))."""
    ks = jax.random.split(key, 6)

    def linear(kw, kb, fan_in, fan_out):
        bound = 1.0 / (fan_in ** 0.5)
        w = jax.random.uniform(kw, (fan_out, fan_in), jnp.float32, -bound, bound)
        b = jax.random.uniform(kb, (fan_out,), jnp.float32, -bound, bound)
        return w, b

    w1, b1 = linear(ks[0], ks[1], OBS_DIM, HIDDEN)
    w2, b2 = linear(ks[2], ks[3], HIDDEN, HIDDEN)
    w3, b3 = linear(ks[4], ks[5], HIDDEN, ACT_DIM)
    return {"w1": w1, "b1": b1, "w2": w2, "b2": b2, "w3": w3, "b3": b3}


def reference_forward_f32(x, p):
    h1 = jnp.maximum(x @ p["w1"].T + p["b1"], 0.0)
    h2 = jnp.maximum(h1 @ p["w2"].T + p["b2"], 0.0)
    return h2 @ p["w3"].T + p["b3"]


def reference_forward_bf16(x, p):
    """Same bf16-operand / f32-accumulate recipe as the kernel."""
    bf = jnp.bfloat16

    def lin(h, w, b):
        y = jnp.dot(h.astype(bf), w.astype(bf).T, preferred_element_type=jnp.float32)
        return y + b.astype(bf).astype(jnp.float32)

    h1 = jnp.maximum(lin(x, p["w1"], p["b1"]), 0.0)
    h2 = jnp.maximum(lin(h1, p["w2"], p["b2"]), 0.0)
    return lin(h2, p["w3"], p["b3"])


# ---------------------------------------------------------------------------
if __name__ == "__main__":
    key = jax.random.PRNGKey(0)
    pkey, xkey1, xkey2 = jax.random.split(key, 3)
    params = init_params(pkey)
    packed = pack_params(params)

    # Small batch (single tile, single 128-lane chunk).
    x_small = jax.random.normal(xkey1, (8, OBS_DIM), jnp.float32)
    out_small = jax.block_until_ready(mlp_policy_forward(x_small, packed))
    assert out_small.shape == (8, ACT_DIM), out_small.shape
    assert jnp.allclose(out_small, reference_forward_bf16(x_small, params),
                        atol=2e-3, rtol=2e-3), "small-batch mismatch (bf16 ref)"
    assert jnp.allclose(out_small, reference_forward_f32(x_small, params),
                        atol=5e-2, rtol=5e-2), "small-batch mismatch (f32 ref)"

    # Ragged larger batch: multi-chunk inner loop + batch padding path.
    x_big = jax.random.normal(xkey2, (300, OBS_DIM), jnp.float32)
    out_big = jax.block_until_ready(mlp_policy_forward(x_big, packed))
    assert out_big.shape == (300, ACT_DIM), out_big.shape
    assert jnp.allclose(out_big, reference_forward_bf16(x_big, params),
                        atol=2e-3, rtol=2e-3), "big-batch mismatch (bf16 ref)"
    assert jnp.allclose(out_big, reference_forward_f32(x_big, params),
                        atol=5e-2, rtol=5e-2), "big-batch mismatch (f32 ref)"

    # Force a multi-tile grid (exercises pipelining + constant weight revisit).
    out_tiled = jax.block_until_ready(
        mlp_policy_forward(x_big, packed, batch_tile=128))
    assert jnp.allclose(out_tiled, out_big, atol=1e-5, rtol=1e-5), "tiling mismatch"

    print("KERNEL_OK")
</pallas_src>

<mosaic_0001>
module attributes {stable_mosaic.version = 11 : i64} {
  func.func @mlp_policy_kernel(%arg0: i32, %arg1: memref<5x128xbf16, #tpu.memory_space<vmem>>, %arg2: memref<72x5xbf16, #tpu.memory_space<vmem>>, %arg3: memref<72x72xbf16, #tpu.memory_space<vmem>>, %arg4: memref<2x72xbf16, #tpu.memory_space<vmem>>, %arg5: memref<2x128xf32, #tpu.memory_space<vmem>>) attributes {dimension_semantics = [#tpu.dimension_semantics<parallel>], iteration_bounds = array<i64: 1>, scalar_prefetch = 0 : i64, scratch_operands = 0 : i64, tpu.core_type = #tpu.core_type<tc>, window_params = [{transform_indices = @transform_0, window_bounds = array<i64: 5, 128>}, {pipeline_mode = #tpu.pipeline_mode<synchronous>, transform_indices = @transform_1, window_bounds = array<i64: 72, 5>}, {pipeline_mode = #tpu.pipeline_mode<synchronous>, transform_indices = @transform_2, window_bounds = array<i64: 72, 72>}, {pipeline_mode = #tpu.pipeline_mode<synchronous>, transform_indices = @transform_3, window_bounds = array<i64: 2, 72>}, {transform_indices = @transform_4, window_bounds = array<i64: 2, 128>}]} {
    %c0 = arith.constant 0 : index
    %c0_0 = arith.constant 0 : index
    %0 = vector.load %arg2[%c0, %c0_0] : memref<72x5xbf16, #tpu.memory_space<vmem>>, vector<72x5xbf16>
    %c0_1 = arith.constant 0 : index
    %c0_2 = arith.constant 0 : index
    %1 = vector.load %arg3[%c0_1, %c0_2] : memref<72x72xbf16, #tpu.memory_space<vmem>>, vector<72x72xbf16>
    %c0_3 = arith.constant 0 : index
    %c0_4 = arith.constant 0 : index
    %2 = vector.load %arg4[%c0_3, %c0_4] : memref<2x72xbf16, #tpu.memory_space<vmem>>, vector<2x72xbf16>
    %c0_i32 = arith.constant 0 : i32
    %c128_i32 = arith.constant 128 : i32
    %3 = arith.muli %c0_i32, %c128_i32 : i32
    %4 = tpu.assume_multiple %3, 128 : i32
    %c0_5 = arith.constant 0 : index
    %5 = arith.index_cast %4 : i32 to index
    %6 = vector.load %arg1[%c0_5, %5] : memref<5x128xbf16, #tpu.memory_space<vmem>>, vector<5x128xbf16>
    %cst = arith.constant dense<0.000000e+00> : vector<72x128xf32>
    %7 = tpu.matmul %0, %6, %cst {dimension_numbers = #tpu.dot_dimension_numbers<[1], [0], [0], [1], [0, 0, 1, 1], [], []>} : vector<72x5xbf16>, vector<5x128xbf16>, vector<72x128xf32> -> vector<72x128xf32>
    %cst_6 = arith.constant 0.000000e+00 : f32
    %8 = vector.broadcast %cst_6 : f32 to vector<72x128xf32>
    %9 = arith.maximumf %7, %8 : vector<72x128xf32>
    %10 = arith.truncf %9 : vector<72x128xf32> to vector<72x128xbf16>
    %cst_7 = arith.constant dense<0.000000e+00> : vector<72x128xf32>
    %11 = tpu.matmul %1, %10, %cst_7 {dimension_numbers = #tpu.dot_dimension_numbers<[1], [0], [0], [1], [0, 0, 1, 1], [], []>} : vector<72x72xbf16>, vector<72x128xbf16>, vector<72x128xf32> -> vector<72x128xf32>
    %cst_8 = arith.constant 0.000000e+00 : f32
    %12 = vector.broadcast %cst_8 : f32 to vector<72x128xf32>
    %13 = arith.maximumf %11, %12 : vector<72x128xf32>
    %14 = arith.truncf %13 : vector<72x128xf32> to vector<72x128xbf16>
    %cst_9 = arith.constant dense<0.000000e+00> : vector<2x128xf32>
    %15 = tpu.matmul %2, %14, %cst_9 {dimension_numbers = #tpu.dot_dimension_numbers<[1], [0], [0], [1], [0, 0, 1, 1], [], []>} : vector<2x72xbf16>, vector<72x128xbf16>, vector<2x128xf32> -> vector<2x128xf32>
    %c0_10 = arith.constant 0 : index
    %16 = arith.index_cast %4 : i32 to index
    %17 = vector.load %arg5[%c0_10, %16] : memref<2x128xf32, #tpu.memory_space<vmem>>, vector<2x128xf32>
    tpu.vector_store %arg5[%c0_10, %16], %15 {strides = array<i32>} : memref<2x128xf32, #tpu.memory_space<vmem>>, vector<2x128xf32>,
    %c1_i32 = arith.constant 1 : i32
    return
  }
  func.func @transform_0(%arg0: i32) -> (i32, i32) {
    %c0_i32 = arith.constant 0 : i32
    %c0_i32_0 = arith.constant 0 : i32
    return %c0_i32, %arg0 : i32, i32
  }
  func.func @transform_1(%arg0: i32) -> (i32, i32) {
    %c0_i32 = arith.constant 0 : i32
    %c0_i32_0 = arith.constant 0 : i32
    %c0_i32_1 = arith.constant 0 : i32
    return %c0_i32, %c0_i32_0 : i32, i32
  }
  func.func @transform_2(%arg0: i32) -> (i32, i32) {
    %c0_i32 = arith.constant 0 : i32
    %c0_i32_0 = arith.constant 0 : i32
    %c0_i32_1 = arith.constant 0 : i32
    return %c0_i32, %c0_i32_0 : i32, i32
  }
  func.func @transform_3(%arg0: i32) -> (i32, i32) {
    %c0_i32 = arith.constant 0 : i32
    %c0_i32_0 = arith.constant 0 : i32
    %c0_i32_1 = arith.constant 0 : i32
    return %c0_i32, %c0_i32_0 : i32, i32
  }
  func.func @transform_4(%arg0: i32) -> (i32, i32) {
    %c0_i32 = arith.constant 0 : i32
    %c0_i32_0 = arith.constant 0 : i32
    return %c0_i32, %arg0 : i32, i32
  }
}

</mosaic_0001>

<llo_original>
// kernel: tpu_custom_call.1
$region0: #{tpu_custom_call.1}
  #allocation0 [shape = 'u32[]', space=smem, size = 0x4, offset = 0x4, fixed_abs, tag = 'smem constant byte address 0x4 - core index']
  #allocation1 [shape = 'u32[72,128]{1,0:T(1,128)}', space=vmem, size = 0x9000, scoped, tag = 'internal scratch']
  %s0 = inlined_call_operand.vmem [shape: bf16[5,128], index: 0, kind: input, shape index: {}]
  %s1 = inlined_call_operand.vmem [shape: bf16[72,5], index: 1, kind: input, shape index: {}]
  %s2 = inlined_call_operand.vmem [shape: bf16[72,72], index: 2, kind: input, shape index: {}]
  %s3 = inlined_call_operand.vmem [shape: bf16[2,72], index: 3, kind: input, shape index: {}]
  %s4 = inlined_call_operand.hbm [shape: f32[2,128], index: 4, kind: output, shape index: {}]
  %s5 = sld [smem:[#allocation0]]
  $region26: #{tpu_custom_call.1} parent=0
    _
  %s7 = ssub.s32 1, %s5
  %s8 = scalar_select 0, %s7, %s5
  $region1: #{tpu_custom_call.1} parent=0
    #allocation2 [shape = 'u8[1024]{0}', space=vmem, size = 0x400, scoped, tag = 'output window, operand 0, single buffered']
    #allocation3 [shape = 's32[1]{0}', space=sflag, size = 0x4, scoped, tag = 'scoped memory for tpu_custom_call.1']
    %9 = vsyncpa [#allocation3], 0
    // Predicated region
    $region2: #{tpu_custom_call.1} parent=1 // pred_check
      _
    $region3: #{tpu_custom_call.1} parent=1 // pred_check_branch
      %11 = sbr.rel (0) target = $region5
    $region4: #{tpu_custom_call.1} parent=1 // pred_region
      _
    $region5: #{tpu_custom_call.1} parent=1 // pred_fallthru
      _
    // Predicated region
    $region6: #{tpu_custom_call.1} parent=1 // pred_check
      _
    $region7: #{tpu_custom_call.1} parent=1 // pred_check_branch
      %13 = sbr.rel (0) target = $region9
    $region8: #{tpu_custom_call.1} parent=1 // pred_region
      _
    $region9: #{tpu_custom_call.1} parent=1 // pred_fallthru
      _
    // Predicated region
    $region10: #{tpu_custom_call.1} parent=1 // pred_check
      _
    $region11: #{tpu_custom_call.1} parent=1 // pred_check_branch
      %15 = sbr.rel (0) target = $region13
    $region12: #{tpu_custom_call.1} parent=1 // pred_region
      _
    $region13: #{tpu_custom_call.1} parent=1 // pred_fallthru
      _
    // Predicated region
    $region14: #{tpu_custom_call.1} parent=1 // pred_check
      _
    $region15: #{tpu_custom_call.1} parent=1 // pred_check_branch
      %17 = sbr.rel (0) target = $region17
    $region16: #{tpu_custom_call.1} parent=1 // pred_region
      _
    $region17: #{tpu_custom_call.1} parent=1 // pred_fallthru
      _
    %v19 = vld [vmem:[%s1] sm:$0xf]
    %v20 = vld [vmem:[%s1 + $0x4] sm:$0xf]
    %v21 = vld [vmem:[%s1 + $0x8] sm:$0xf]
    %v22 = vld [vmem:[%s1 + $0xc] sm:$0xf]
    %v23 = vld [vmem:[%s1 + $0x10] sm:$0xf]
    %v24 = vld [vmem:[%s1 + $0x14] sm:$0xf]
    %v25 = vld [vmem:[%s1 + $0x18] sm:$0xf]
    %v26 = vld [vmem:[%s1 + $0x1c] sm:$0xf]
    %v27 = vld [vmem:[%s1 + $0x20] sm:$0xf]
    %v28 = vld [vmem:[%s2] sm:$0xf]
    %v29 = vld [vmem:[%s2 + $0x4] sm:$0xf]
    %v30 = vld [vmem:[%s2 + $0x8] sm:$0xf]
    %v31 = vld [vmem:[%s2 + $0xc] sm:$0xf]
    %v32 = vld [vmem:[%s2 + $0x10] sm:$0xf]
    %v33 = vld [vmem:[%s2 + $0x14] sm:$0xf]
    %v34 = vld [vmem:[%s2 + $0x18] sm:$0xf]
    %v35 = vld [vmem:[%s2 + $0x1c] sm:$0xf]
    %v36 = vld [vmem:[%s2 + $0x20] sm:$0xf]
    %v37 = vld [vmem:[%s3] sm:$0x1]
    %v38 = vld [vmem:[%s0] sm:$0x7]
    %v48 = vunpack.c.l.b16 %v19
    %v49 = vunpack.c.l.b16 %v20
    %v50 = vunpack.c.l.b16 %v21
    %v51 = vunpack.c.l.b16 %v22
    %v52 = vunpack.c.l.b16 %v23
    %v53 = vunpack.c.l.b16 %v24
    %v54 = vunpack.c.l.b16 %v25
    %v55 = vunpack.c.l.b16 %v26
    %v56 = vunpack.c.l.b16 %v27
    %v57 = vpack.c.b16 %v49, %v48
    %v58 = vpack.c.b16 %v51, %v50
    %v59 = vpack.c.b16 %v53, %v52
    %v60 = vpack.c.b16 %v55, %v54
    %v61 = vpack.c.b16 %v56, %v56
    %vm62 = vcmask 39936
    %v64 = vsel %vm62, %v57, 0
    %v67 = vsel %vm62, %v58, 0
    %v70 = vsel %vm62, %v59, 0
    %v73 = vsel %vm62, %v60, 0
    %v76 = vsel %vm62, %v61, 0
    %vm78 = vcmask 1041408
    %vm79 = vcmask 1042432
    %v80 = vsel %vm78, 4294967295, 65535
    %v81 = vsel %vm79, %v80, 0
    %v83 = vand.u32 %v38, %v81
    %85 = vmatpush.bf16.msra.mxu0 0
    %86 = vmatpush.bf16.msra.mxu0 0
    %87 = vmatpush.bf16.msra.mxu0 0
    %88 = vmatpush.bf16.msra.mxu0 0
    %89 = vmatpush.bf16.msra.mxu0 0
    %90 = vmatpush.bf16.msra.mxu0 0
    %91 = vmatpush.bf16.msra.mxu0 0
    %92 = vmatpush.bf16.msra.mxu0 %v83
    %93 = vmatmul.bf16.gmra.mxu0 %v64
    %v94 = vpop.f32.mrf.mxu0
    %v95 = vadd.f32 0.0, %v94
    %v96 = vpop.f32.mrf.mxu0
    %v97 = vadd.f32 0.0, %v96
    %98 = vmatmul.bf16.gmra.mxu0 %v67
    %v99 = vpop.f32.mrf.mxu0
    %v100 = vadd.f32 0.0, %v99
    %v101 = vpop.f32.mrf.mxu0
    %v102 = vadd.f32 0.0, %v101
    %103 = vmatmul.bf16.gmra.mxu0 %v70
    %v104 = vpop.f32.mrf.mxu0
    %v105 = vadd.f32 0.0, %v104
    %v106 = vpop.f32.mrf.mxu0
    %v107 = vadd.f32 0.0, %v106
    %108 = vmatmul.bf16.gmra.mxu0 %v73
    %v109 = vpop.f32.mrf.mxu0
    %v110 = vadd.f32 0.0, %v109
    %v111 = vpop.f32.mrf.mxu0
    %v112 = vadd.f32 0.0, %v111
    %113 = vmatmul.bf16.gmra.mxu0 %v76
    %v114 = vpop.f32.mrf.mxu0
    %v115 = vadd.f32 0.0, %v114
    %v116 = vpop.f32.mrf.mxu0
    %117 = vdwg.mxu0
    %v118 = vmax.f32 %v95, 0.0
    %v119 = vmax.f32 %v97, 0.0
    %v120 = vmax.f32 %v100, 0.0
    %v121 = vmax.f32 %v102, 0.0
    %v122 = vmax.f32 %v105, 0.0
    %v123 = vmax.f32 %v107, 0.0
    %v124 = vmax.f32 %v110, 0.0
    %v125 = vmax.f32 %v112, 0.0
    %v126 = vmax.f32 %v115, 0.0
    %v127 = vpack.c.bf16 %v119, %v118
    %v128 = vpack.c.bf16 %v121, %v120
    %v129 = vpack.c.bf16 %v123, %v122
    %v130 = vpack.c.bf16 %v125, %v124
    %v131 = vpack.c.bf16 %v126, %v126
    %v141 = vunpack.c.l.b16 %v28
    %v142 = vunpack.c.l.b16 %v29
    %v143 = vunpack.c.l.b16 %v30
    %v144 = vunpack.c.l.b16 %v31
    %v145 = vunpack.c.l.b16 %v32
    %v146 = vunpack.c.l.b16 %v33
    %v147 = vunpack.c.l.b16 %v34
    %v148 = vunpack.c.l.b16 %v35
    %v149 = vunpack.c.l.b16 %v36
    %v150 = vpack.c.b16 %v142, %v141
    %v151 = vpack.c.b16 %v144, %v143
    %v152 = vpack.c.b16 %v146, %v145
    %v153 = vpack.c.b16 %v148, %v147
    %v154 = vpack.c.b16 %v149, %v149
    %vm155 = vcmask 588800
    %v157 = vsel %vm155, %v150, 0
    %v160 = vsel %vm155, %v151, 0
    %v163 = vsel %vm155, %v152, 0
    %v166 = vsel %vm155, %v153, 0
    %v169 = vsel %vm155, %v154, 0
    %vm171 = vcmask 1043456
    %v173 = vsel %vm171, %v131, 0
    %175 = vmatpush.bf16.msra.mxu0 0
    %176 = vmatpush.bf16.msra.mxu0 0
    %177 = vmatpush.bf16.msra.mxu0 0
    %178 = vmatpush.bf16.msra.mxu0 %v173
    %179 = vmatpush.bf16.msra.mxu0 %v130
    %180 = vmatpush.bf16.msra.mxu0 %v129
    %181 = vmatpush.bf16.msra.mxu0 %v128
    %182 = vmatpush.bf16.msra.mxu0 %v127
    %183 = vmatmul.bf16.gmra.mxu0 %v157
    %v184 = vpop.f32.mrf.mxu0
    %v185 = vadd.f32 0.0, %v184
    %v186 = vpop.f32.mrf.mxu0
    %v187 = vadd.f32 0.0, %v186
    %188 = vmatmul.bf16.gmra.mxu0 %v160
    %v189 = vpop.f32.mrf.mxu0
    %v190 = vadd.f32 0.0, %v189
    %v191 = vpop.f32.mrf.mxu0
    %v192 = vadd.f32 0.0, %v191
    %193 = vmatmul.bf16.gmra.mxu0 %v163
    %v194 = vpop.f32.mrf.mxu0
    %v195 = vadd.f32 0.0, %v194
    %v196 = vpop.f32.mrf.mxu0
    %v197 = vadd.f32 0.0, %v196
    %198 = vmatmul.bf16.gmra.mxu0 %v166
    %v199 = vpop.f32.mrf.mxu0
    %v200 = vadd.f32 0.0, %v199
    %v201 = vpop.f32.mrf.mxu0
    %v202 = vadd.f32 0.0, %v201
    %203 = vmatmul.bf16.gmra.mxu0 %v169
    %v204 = vpop.f32.mrf.mxu0
    %v205 = vadd.f32 0.0, %v204
    %v206 = vpop.f32.mrf.mxu0
    %207 = vdwg.mxu0
    %v208 = vmax.f32 %v185, 0.0
    %v209 = vmax.f32 %v187, 0.0
    %v210 = vmax.f32 %v190, 0.0
    %v211 = vmax.f32 %v192, 0.0
    %v212 = vmax.f32 %v195, 0.0
    %v213 = vmax.f32 %v197, 0.0
    %v214 = vmax.f32 %v200, 0.0
    %v215 = vmax.f32 %v202, 0.0
    %v216 = vmax.f32 %v205, 0.0
    %v217 = vpack.c.bf16 %v209, %v208
    %v218 = vpack.c.bf16 %v211, %v210
    %v219 = vpack.c.bf16 %v213, %v212
    %v220 = vpack.c.bf16 %v215, %v214
    %v221 = vpack.c.bf16 %v216, %v216
    %v223 = vsel %vm155, %v37, 0
    %v226 = vsel %vm171, %v221, 0
    %228 = vmatpush.bf16.msra.mxu0 0
    %229 = vmatpush.bf16.msra.mxu0 0
    %230 = vmatpush.bf16.msra.mxu0 0
    %231 = vmatpush.bf16.msra.mxu0 %v226
    %232 = vmatpush.bf16.msra.mxu0 %v220
    %233 = vmatpush.bf16.msra.mxu0 %v219
    %234 = vmatpush.bf16.msra.mxu0 %v218
    %235 = vmatpush.bf16.msra.mxu0 %v217
    %236 = vmatmul.bf16.gmra.mxu0 %v223
    %v237 = vpop.f32.mrf.mxu0
    %v238 = vadd.f32 0.0, %v237
    %v239 = vpop.f32.mrf.mxu0
    %240 = vdwg.mxu0
    %241 = vst [vmem:[#allocation2] sm:$0x3] %v238
    // Predicated region
    $region18: #{tpu_custom_call.1} parent=1 // pred_check
      _
    $region19: #{tpu_custom_call.1} parent=1 // pred_check_branch
      %243 = sbr.rel (0) target = $region21
    $region20: #{tpu_custom_call.1} parent=1 // pred_region
      %245 = vsyncadd [#allocation3], 0
      %s247 = sshll.u32 [#allocation2], 4
      %s248 = int_to_ptr.vmem [resolvable:$true] %s247
      %s249 = sshll.u32 %s4, 4
      %s250 = int_to_ptr.hbm [resolvable:$true] %s249
      %252 = dma.vmem_to_hbm [thread:$0]  %s248, 32, %s250, [#allocation3]
    $region21: #{tpu_custom_call.1} parent=1 // pred_fallthru
      _
    // Predicated region
    $region22: #{tpu_custom_call.1} parent=1 // pred_check
      _
    $region23: #{tpu_custom_call.1} parent=1 // pred_check_branch
      %254 = sbr.rel (0) target = $region25
    $region24: #{tpu_custom_call.1} parent=1 // pred_region
      %256 = dma.done [#allocation3], 32
    $region25: #{tpu_custom_call.1} parent=1 // pred_fallthru
      _
    %257 = vsyncpa [#allocation3], 1

</llo_original>
